<compile_context>
chip_gen: v5e
topology: v5e:2x2
jax: 0.10.0
libtpu: 0.0.40
codegen_flags: <defaults>
</compile_context>

<pallas_src>
import functools

import jax
import jax.numpy as jnp
from jax.experimental import pallas as pl
from jax.experimental.pallas import tpu as pltpu


_INV_SQRT2 = 0.7071067811865476


def _round_up(x, a):
    return ((x + a - 1) // a) * a


def _erf(x):
    # Abramowitz & Stegun 7.1.26 rational approximation, |err| <= 1.5e-7.
    # Matches PyTorch's exact erf-based GELU to well below bf16 precision and
    # avoids relying on an erf lowering inside Mosaic.
    a1, a2, a3, a4, a5 = (0.254829592, -0.284496736, 1.421413741,
                          -1.453152027, 1.061405429)
    p = 0.3275911
    sign = jnp.where(x >= 0.0, 1.0, -1.0)
    ax = jnp.abs(x)
    t = 1.0 / (1.0 + p * ax)
    poly = ((((a5 * t + a4) * t + a3) * t + a2) * t + a1) * t
    return sign * (1.0 - poly * jnp.exp(-ax * ax))


def _gelu_exact(x):
    # torch.nn.functional.gelu default ('none') = 0.5*x*(1+erf(x/sqrt(2)))
    return 0.5 * x * (1.0 + _erf(x * _INV_SQRT2))


def lm_head_kernel(x_ref, w1_ref, b1_ref, g_ref, beta_ref, w2_ref, b2_ref,
                   o_ref, h_ref, *, eps):
    """Grid = (row tiles i, vocab tiles j), j innermost ('arbitrary').

    The dense+GELU+LayerNorm result depends only on the row tile i, so it is
    computed once per i (at j == 0) into the bf16 VMEM scratch h_ref and
    reused for every vocab tile j.  Matmul operands are bf16; accumulation
    and GELU/LayerNorm statistics are f32.
    """
    j = pl.program_id(1)

    @pl.when(j == 0)
    def _():
        # dense: (tm, D)bf16 @ (D, D)bf16 -> f32 on the MXU
        h = jnp.dot(x_ref[...], w1_ref[...],
                    preferred_element_type=jnp.float32)
        h = h + b1_ref[...]                      # bias in f32
        h = _gelu_exact(h)                       # exact (erf) GELU in f32
        # LayerNorm over the feature axis, f32 statistics
        mean = jnp.mean(h, axis=-1, keepdims=True)
        var = jnp.mean((h - mean) * (h - mean), axis=-1, keepdims=True)
        hn = (h - mean) * jax.lax.rsqrt(var + eps)
        hn = hn * g_ref[...] + beta_ref[...]
        h_ref[...] = hn.astype(h_ref.dtype)      # store bf16 activations

    # decoder: (tm, D)bf16 @ (D, tv)bf16 -> f32, + bias
    logits = jnp.dot(h_ref[...], w2_ref[...],
                     preferred_element_type=jnp.float32) + b2_ref[...]
    o_ref[...] = logits.astype(o_ref.dtype)


def _device_info():
    """(device_kind lowercase, physical VMEM capacity in bytes)."""
    kind = ""
    try:
        kind = jax.devices()[0].device_kind.lower()
    except Exception:
        pass
    cap = None
    try:
        cap = int(pltpu.get_tpu_info().vmem_capacity_bytes)
    except Exception:
        cap = None
    if not cap:
        cap = (64 << 20) if ("v7" in kind or "7x" in kind) else (128 << 20)
    return kind, cap


def _vmem_estimate(tm, tv, D, out_bytes):
    """Rough per-call VMEM footprint of the chosen tiling."""
    return (2 * tm * D * 2            # x tiles (bf16, double-buffered)
            + D * D * 2               # w1 (whole-array resident, single copy)
            + 3 * D * 4               # b1 / gamma / beta (f32, single copy)
            + tm * D * 2              # h scratch (bf16)
            + 2 * tm * D * 4          # f32 (tm, D) epilogue intermediates
            + 2 * D * tv * 2          # w2 tiles (bf16, double-buffered)
            + 2 * tv * 4              # b2 tiles (f32, double-buffered)
            + 2 * tm * tv * out_bytes)  # output tiles (double-buffered)


def bert_lm_head(hidden_states, w1, b1, gamma, beta, w2, b2,
                 *, eps=1e-12, tm=None, tv=None, out_dtype=jnp.bfloat16,
                 w2_buffers=2, vmem_limit_bytes=None):
    B, S, D = hidden_states.shape
    assert w1.shape == (D, D)
    V = w2.shape[1]
    M = B * S

    # ---------------- generation-aware tile targets ----------------
    kind, vmem_cap = _device_info()
    is_v7 = ("v7" in kind) or ("7x" in kind)
    if "v6" in kind:
        tm_t, tv_t = 1024, 2048      # v6e needs ~655 FLOP/byte -> big tm
    elif "v5" in kind:
        tm_t, tv_t = 512, 2048       # v5e roofline crossover ~240 FLOP/byte
    else:
        tm_t, tv_t = 512, 1024       # v7x / unknown: conservative (64 MiB VMEM)
    user_tm, user_tv = tm, tv
    if user_tm is not None:
        tm_t = user_tm
    if user_tv is not None:
        tv_t = user_tv

    # ---------------- row tiling (pad M to a tile multiple) ----------------
    if M <= tm_t:
        tm = _round_up(M, 16)        # 16-aligned (bf16 sublane packing)
        M_pad = tm
    else:
        tm = tm_t
        M_pad = _round_up(M, tm)
    # v7x has 2 TensorCores: make sure the "parallel" i axis has >= 2 tiles.
    if is_v7 and user_tm is None and M_pad // tm < 2 and M_pad >= 32:
        tm = _round_up((M_pad + 1) // 2, 16)
        M_pad = _round_up(M_pad, tm)

    # ---------------- vocab tiling (pad V; never fall back to tv=V) --------
    if V <= tv_t:
        tv = _round_up(V, 128)
        V_pad = tv
    else:
        tv = tv_t
        V_pad = _round_up(V, tv)

    out_bytes = jnp.dtype(out_dtype).itemsize

    # Shrink tiles (tv first: tm sets the W2 arithmetic intensity) if the
    # estimated footprint would not fit physical VMEM.  Halving preserves
    # divisibility of M_pad / V_pad.
    budget = vmem_cap - (8 << 20)
    while _vmem_estimate(tm, tv, D, out_bytes) > budget:
        if tv > 512 and tv % 256 == 0:
            tv //= 2
        elif tm > 256 and tm % 32 == 0:
            tm //= 2
        else:
            break

    assert M_pad % tm == 0 and V_pad % tv == 0
    assert tm % 8 == 0 and tv % 128 == 0

    if vmem_limit_bytes is None:
        est = _vmem_estimate(tm, tv, D, out_bytes)
        vmem_limit_bytes = max(32 << 20, int(est * 1.5))
        vmem_limit_bytes = min(vmem_limit_bytes, vmem_cap - (4 << 20))

    # ---------------- operand preparation ----------------
    # bf16 matmul operands (MXU-native; halves the dominant W2 HBM stream).
    # The casts/pads are no-ops if the caller already holds bf16 / pre-padded
    # weights -- for production, hoist them out of the per-call path.
    x2 = hidden_states.reshape(M, D).astype(jnp.bfloat16)
    if M_pad != M:
        x2 = jnp.pad(x2, ((0, M_pad - M), (0, 0)))
    w1b = w1.astype(jnp.bfloat16)
    w2b = w2.astype(jnp.bfloat16)
    b2f = b2.astype(jnp.float32)
    if V_pad != V:
        w2b = jnp.pad(w2b, ((0, 0), (0, V_pad - V)))
        b2f = jnp.pad(b2f, ((0, V_pad - V),))
    b1_2 = b1.reshape(1, D).astype(jnp.float32)
    g_2 = gamma.reshape(1, D).astype(jnp.float32)
    be_2 = beta.reshape(1, D).astype(jnp.float32)
    b2_2 = b2f.reshape(1, V_pad)

    # Decoder weight tile spec; depth-2 pipelining already hides the W2 DMA
    # once tm >= 512 -- deeper buffering only spends scarce VMEM.
    if w2_buffers > 2:
        w2_spec = pl.BlockSpec((D, tv), lambda i, j: (0, j),
                               pipeline_mode=pl.Buffered(w2_buffers))
    else:
        w2_spec = pl.BlockSpec((D, tv), lambda i, j: (0, j))

    # Constant-index operands: whole-array VMEM residency (copied in once,
    # no per-step pipelining, no wasted double buffer).
    vmem_whole = pl.BlockSpec(memory_space=pltpu.MemorySpace.VMEM)

    kernel = functools.partial(lm_head_kernel, eps=eps)
    out = pl.pallas_call(
        kernel,
        out_shape=jax.ShapeDtypeStruct((M_pad, V_pad), out_dtype),
        grid_spec=pltpu.PrefetchScalarGridSpec(
            num_scalar_prefetch=0,
            # j (vocab) must stay innermost + "arbitrary": h_ref is written at
            # j == 0 and reused for every vocab tile of the same row tile i.
            grid=(M_pad // tm, V_pad // tv),
            in_specs=[
                pl.BlockSpec((tm, D), lambda i, j: (i, 0)),   # x rows (bf16)
                vmem_whole,                                   # dense W (bf16)
                vmem_whole,                                   # dense b (f32)
                vmem_whole,                                   # LN gamma (f32)
                vmem_whole,                                   # LN beta (f32)
                w2_spec,                                      # decoder W tile
                pl.BlockSpec((1, tv), lambda i, j: (0, j)),   # decoder b tile
            ],
            out_specs=pl.BlockSpec((tm, tv), lambda i, j: (i, j)),
            scratch_shapes=[pltpu.VMEM((tm, D), jnp.bfloat16)],
        ),
        compiler_params=pltpu.CompilerParams(
            dimension_semantics=("parallel", "arbitrary"),
            vmem_limit_bytes=vmem_limit_bytes),
    )(x2, w1b, b1_2, g_2, be_2, w2b, b2_2)

    return out[:M, :V].reshape(B, S, V)


def _reference_f32(hidden_states, w1, b1, gamma, beta, w2, b2, eps):
    h = hidden_states @ w1 + b1
    h = 0.5 * h * (1.0 + jax.scipy.special.erf(h / jnp.sqrt(2.0)))
    mean = jnp.mean(h, axis=-1, keepdims=True)
    var = jnp.mean((h - mean) ** 2, axis=-1, keepdims=True)
    h = (h - mean) * jax.lax.rsqrt(var + eps) * gamma + beta
    return h @ w2 + b2


def _reference_bf16(hidden_states, w1, b1, gamma, beta, w2, b2, eps):
    # Mirrors the kernel's precision choices: bf16 matmul operands, f32
    # accumulation, f32 GELU/LayerNorm, bf16 stored activations.
    B, S, D = hidden_states.shape
    x = hidden_states.reshape(B * S, D).astype(jnp.bfloat16)
    h = jnp.dot(x, w1.astype(jnp.bfloat16),
                preferred_element_type=jnp.float32) + b1
    h = 0.5 * h * (1.0 + jax.scipy.special.erf(h / jnp.sqrt(2.0)))
    mean = jnp.mean(h, axis=-1, keepdims=True)
    var = jnp.mean((h - mean) ** 2, axis=-1, keepdims=True)
    h = (h - mean) * jax.lax.rsqrt(var + eps) * gamma + beta
    h = h.astype(jnp.bfloat16)
    logits = jnp.dot(h, w2.astype(jnp.bfloat16),
                     preferred_element_type=jnp.float32) + b2
    return logits.reshape(B, S, -1)


if __name__ == "__main__":
    B, S, D, V = 2, 8, 32, 256
    norm_eps = 1e-12

    key = jax.random.PRNGKey(0)
    k1, k2, k3, k4, k5, k6 = jax.random.split(key, 6)

    x = jax.random.normal(k1, (B, S, D), dtype=jnp.float32)
    # Parameters (deterministic synthetic init; Linear weights stored (in, out)).
    w1 = jax.random.normal(k2, (D, D), dtype=jnp.float32) * 0.02
    b1 = jax.random.normal(k3, (D,), dtype=jnp.float32) * 0.02
    gamma = jnp.ones((D,), dtype=jnp.float32) + \
        jax.random.normal(k4, (D,), dtype=jnp.float32) * 0.01
    beta = jax.random.normal(k5, (D,), dtype=jnp.float32) * 0.01
    w2 = jax.random.normal(k6, (D, V), dtype=jnp.float32) * 0.02
    b2 = jnp.zeros((V,), dtype=jnp.float32)

    logits = bert_lm_head(x, w1, b1, gamma, beta, w2, b2, eps=norm_eps)
    logits = jax.block_until_ready(logits)
    assert logits.shape == (B, S, V)

    # Tight check against a precision-matched (bf16-operand) reference.
    ref_bf16 = _reference_bf16(x, w1, b1, gamma, beta, w2, b2, norm_eps)
    err_bf16 = float(jnp.max(jnp.abs(logits.astype(jnp.float32) - ref_bf16)))
    assert err_bf16 < 5e-3, err_bf16

    # Looser check against the full-f32 reference (bf16 operand/output rounding).
    ref_f32 = _reference_f32(x, w1, b1, gamma, beta, w2, b2, norm_eps)
    err_f32 = float(jnp.max(jnp.abs(logits.astype(jnp.float32) - ref_f32)))
    assert err_f32 < 3e-2, err_f32

    print("KERNEL_OK")
</pallas_src>

<mosaic_0001>
module attributes {stable_mosaic.version = 11 : i64} {
  func.func @lm_head_kernel(%arg0: i32, %arg1: i32, %arg2: memref<16x32xbf16, #tpu.memory_space<vmem>>, %arg3: memref<32x32xbf16, #tpu.memory_space<vmem>>, %arg4: memref<1x32xf32, #tpu.memory_space<vmem>>, %arg5: memref<1x32xf32, #tpu.memory_space<vmem>>, %arg6: memref<1x32xf32, #tpu.memory_space<vmem>>, %arg7: memref<32x256xbf16, #tpu.memory_space<vmem>>, %arg8: memref<1x256xf32, #tpu.memory_space<vmem>>, %arg9: memref<16x256xbf16, #tpu.memory_space<vmem>>, %arg10: memref<16x32xbf16, #tpu.memory_space<vmem>>) attributes {dimension_semantics = [#tpu.dimension_semantics<parallel>, #tpu.dimension_semantics<arbitrary>], iteration_bounds = array<i64: 1, 1>, scalar_prefetch = 0 : i64, scratch_operands = 1 : i64, tpu.core_type = #tpu.core_type<tc>, window_params = [{transform_indices = @transform_0, window_bounds = array<i64: 16, 32>}, {pipeline_mode = #tpu.pipeline_mode<synchronous>, transform_indices = @transform_1, window_bounds = array<i64: 32, 32>}, {pipeline_mode = #tpu.pipeline_mode<synchronous>, transform_indices = @transform_2, window_bounds = array<i64: 1, 32>}, {pipeline_mode = #tpu.pipeline_mode<synchronous>, transform_indices = @transform_3, window_bounds = array<i64: 1, 32>}, {pipeline_mode = #tpu.pipeline_mode<synchronous>, transform_indices = @transform_4, window_bounds = array<i64: 1, 32>}, {transform_indices = @transform_5, window_bounds = array<i64: 32, 256>}, {transform_indices = @transform_6, window_bounds = array<i64: 1, 256>}, {transform_indices = @transform_7, window_bounds = array<i64: 16, 256>}]} {
    %c0_i32 = arith.constant 0 : i32
    %0 = arith.cmpi eq, %arg1, %c0_i32 : i32
    %1 = arith.extui %0 : i1 to i32
    %c0_i32_0 = arith.constant 0 : i32
    %2 = arith.cmpi ne, %1, %c0_i32_0 : i32
    scf.if %2 {
      %c0_8 = arith.constant 0 : index
      %c0_9 = arith.constant 0 : index
      %11 = vector.load %arg2[%c0_8, %c0_9] : memref<16x32xbf16, #tpu.memory_space<vmem>>, vector<16x32xbf16>
      %c0_10 = arith.constant 0 : index
      %c0_11 = arith.constant 0 : index
      %12 = vector.load %arg3[%c0_10, %c0_11] : memref<32x32xbf16, #tpu.memory_space<vmem>>, vector<32x32xbf16>
      %cst_12 = arith.constant dense<0.000000e+00> : vector<16x32xf32>
      %13 = tpu.matmul %11, %12, %cst_12 {dimension_numbers = #tpu.dot_dimension_numbers<[1], [0], [0], [1], [0, 0, 1, 1], [], []>} : vector<16x32xbf16>, vector<32x32xbf16>, vector<16x32xf32> -> vector<16x32xf32>
      %c0_13 = arith.constant 0 : index
      %c0_14 = arith.constant 0 : index
      %14 = vector.load %arg4[%c0_13, %c0_14] : memref<1x32xf32, #tpu.memory_space<vmem>>, vector<1x32xf32>
      %15 = vector.broadcast %14 : vector<1x32xf32> to vector<16x32xf32>
      %16 = arith.addf %13, %15 : vector<16x32xf32>
      %cst_15 = arith.constant 5.000000e-01 : f32
      %17 = vector.broadcast %cst_15 : f32 to vector<16x32xf32>
      %18 = arith.mulf %17, %16 : vector<16x32xf32>
      %cst_16 = arith.constant 0.707106769 : f32
      %19 = vector.broadcast %cst_16 : f32 to vector<16x32xf32>
      %20 = arith.mulf %16, %19 : vector<16x32xf32>
      %cst_17 = arith.constant 0.000000e+00 : f32
      %21 = vector.broadcast %cst_17 : f32 to vector<16x32xf32>
      %22 = arith.cmpf oge, %20, %21 : vector<16x32xf32>
      %cst_18 = arith.constant 1.000000e+00 : f32
      %cst_19 = arith.constant -1.000000e+00 : f32
      %23 = vector.broadcast %cst_18 : f32 to vector<16x32xf32>
      %24 = vector.broadcast %cst_19 : f32 to vector<16x32xf32>
      %25 = arith.select %22, %23, %24 : vector<16x32xi1>, vector<16x32xf32>
      %26 = math.absf %20 : vector<16x32xf32>
      %cst_20 = arith.constant 0.327591091 : f32
      %27 = vector.broadcast %cst_20 : f32 to vector<16x32xf32>
      %28 = arith.mulf %27, %26 : vector<16x32xf32>
      %cst_21 = arith.constant 1.000000e+00 : f32
      %29 = vector.broadcast %cst_21 : f32 to vector<16x32xf32>
      %30 = arith.addf %29, %28 : vector<16x32xf32>
      %cst_22 = arith.constant 1.000000e+00 : f32
      %31 = vector.broadcast %cst_22 : f32 to vector<16x32xf32>
      %32 = arith.divf %31, %30 : vector<16x32xf32>
      %cst_23 = arith.constant 1.06140542 : f32
      %33 = vector.broadcast %cst_23 : f32 to vector<16x32xf32>
      %34 = arith.mulf %33, %32 : vector<16x32xf32>
      %cst_24 = arith.constant -1.45315206 : f32
      %35 = vector.broadcast %cst_24 : f32 to vector<16x32xf32>
      %36 = arith.addf %34, %35 : vector<16x32xf32>
      %37 = arith.mulf %36, %32 : vector<16x32xf32>
      %cst_25 = arith.constant 1.42141378 : f32
      %38 = vector.broadcast %cst_25 : f32 to vector<16x32xf32>
      %39 = arith.addf %37, %38 : vector<16x32xf32>
      %40 = arith.mulf %39, %32 : vector<16x32xf32>
      %cst_26 = arith.constant -0.284496725 : f32
      %41 = vector.broadcast %cst_26 : f32 to vector<16x32xf32>
      %42 = arith.addf %40, %41 : vector<16x32xf32>
      %43 = arith.mulf %42, %32 : vector<16x32xf32>
      %cst_27 = arith.constant 0.254829586 : f32
      %44 = vector.broadcast %cst_27 : f32 to vector<16x32xf32>
      %45 = arith.addf %43, %44 : vector<16x32xf32>
      %46 = arith.mulf %45, %32 : vector<16x32xf32>
      %cst_28 = arith.constant 0.000000e+00 : f32
      %47 = vector.broadcast %cst_28 : f32 to vector<16x32xf32>
      %48 = arith.subf %47, %26 : vector<16x32xf32>
      %49 = arith.mulf %48, %26 : vector<16x32xf32>
      %50 = math.exp %49 : vector<16x32xf32>
      %51 = arith.mulf %46, %50 : vector<16x32xf32>
      %cst_29 = arith.constant 1.000000e+00 : f32
      %52 = vector.broadcast %cst_29 : f32 to vector<16x32xf32>
      %53 = arith.subf %52, %51 : vector<16x32xf32>
      %54 = arith.mulf %25, %53 : vector<16x32xf32>
      %cst_30 = arith.constant 1.000000e+00 : f32
      %55 = vector.broadcast %cst_30 : f32 to vector<16x32xf32>
      %56 = arith.addf %55, %54 : vector<16x32xf32>
      %57 = arith.mulf %18, %56 : vector<16x32xf32>
      %cst_31 = arith.constant dense<0.000000e+00> : vector<16xf32>
      %58 = vector.multi_reduction <add>, %57, %cst_31 [1] : vector<16x32xf32> to vector<16xf32>
      %59 = vector.shape_cast %58 : vector<16xf32> to vector<16x1xf32>
      %cst_32 = arith.constant 3.200000e+01 : f32
      %60 = vector.broadcast %cst_32 : f32 to vector<16x1xf32>
      %61 = arith.divf %59, %60 : vector<16x1xf32>
      %62 = vector.broadcast %61 : vector<16x1xf32> to vector<16x32xf32>
      %63 = arith.subf %57, %62 : vector<16x32xf32>
      %64 = vector.broadcast %61 : vector<16x1xf32> to vector<16x32xf32>
      %65 = arith.subf %57, %64 : vector<16x32xf32>
      %66 = arith.mulf %63, %65 : vector<16x32xf32>
      %cst_33 = arith.constant dense<0.000000e+00> : vector<16xf32>
      %67 = vector.multi_reduction <add>, %66, %cst_33 [1] : vector<16x32xf32> to vector<16xf32>
      %68 = vector.shape_cast %67 : vector<16xf32> to vector<16x1xf32>
      %cst_34 = arith.constant 3.200000e+01 : f32
      %69 = vector.broadcast %cst_34 : f32 to vector<16x1xf32>
      %70 = arith.divf %68, %69 : vector<16x1xf32>
      %71 = vector.broadcast %61 : vector<16x1xf32> to vector<16x32xf32>
      %72 = arith.subf %57, %71 : vector<16x32xf32>
      %cst_35 = arith.constant 9.99999996E-13 : f32
      %73 = vector.broadcast %cst_35 : f32 to vector<16x1xf32>
      %74 = arith.addf %70, %73 : vector<16x1xf32>
      %75 = math.rsqrt %74 : vector<16x1xf32>
      %76 = vector.broadcast %75 : vector<16x1xf32> to vector<16x32xf32>
      %77 = arith.mulf %72, %76 : vector<16x32xf32>
      %c0_36 = arith.constant 0 : index
      %c0_37 = arith.constant 0 : index
      %78 = vector.load %arg5[%c0_36, %c0_37] : memref<1x32xf32, #tpu.memory_space<vmem>>, vector<1x32xf32>
      %79 = vector.broadcast %78 : vector<1x32xf32> to vector<16x32xf32>
      %80 = arith.mulf %77, %79 : vector<16x32xf32>
      %c0_38 = arith.constant 0 : index
      %c0_39 = arith.constant 0 : index
      %81 = vector.load %arg6[%c0_38, %c0_39] : memref<1x32xf32, #tpu.memory_space<vmem>>, vector<1x32xf32>
      %82 = vector.broadcast %81 : vector<1x32xf32> to vector<16x32xf32>
      %83 = arith.addf %80, %82 : vector<16x32xf32>
      %84 = arith.truncf %83 : vector<16x32xf32> to vector<16x32xbf16>
      %c0_40 = arith.constant 0 : index
      %c0_41 = arith.constant 0 : index
      %85 = vector.load %arg10[%c0_40, %c0_41] : memref<16x32xbf16, #tpu.memory_space<vmem>>, vector<16x32xbf16>
      tpu.vector_store %arg10[%c0_40, %c0_41], %84 {strides = array<i32>} : memref<16x32xbf16, #tpu.memory_space<vmem>>, vector<16x32xbf16>,
    } else {
    }
    %c0 = arith.constant 0 : index
    %c0_1 = arith.constant 0 : index
    %3 = vector.load %arg10[%c0, %c0_1] : memref<16x32xbf16, #tpu.memory_space<vmem>>, vector<16x32xbf16>
    %c0_2 = arith.constant 0 : index
    %c0_3 = arith.constant 0 : index
    %4 = vector.load %arg7[%c0_2, %c0_3] : memref<32x256xbf16, #tpu.memory_space<vmem>>, vector<32x256xbf16>
    %cst = arith.constant dense<0.000000e+00> : vector<16x256xf32>
    %5 = tpu.matmul %3, %4, %cst {dimension_numbers = #tpu.dot_dimension_numbers<[1], [0], [0], [1], [0, 0, 1, 1], [], []>} : vector<16x32xbf16>, vector<32x256xbf16>, vector<16x256xf32> -> vector<16x256xf32>
    %c0_4 = arith.constant 0 : index
    %c0_5 = arith.constant 0 : index
    %6 = vector.load %arg8[%c0_4, %c0_5] : memref<1x256xf32, #tpu.memory_space<vmem>>, vector<1x256xf32>
    %7 = vector.broadcast %6 : vector<1x256xf32> to vector<16x256xf32>
    %8 = arith.addf %5, %7 : vector<16x256xf32>
    %9 = arith.truncf %8 : vector<16x256xf32> to vector<16x256xbf16>
    %c0_6 = arith.constant 0 : index
    %c0_7 = arith.constant 0 : index
    %10 = vector.load %arg9[%c0_6, %c0_7] : memref<16x256xbf16, #tpu.memory_space<vmem>>, vector<16x256xbf16>
    tpu.vector_store %arg9[%c0_6, %c0_7], %9 {strides = array<i32>} : memref<16x256xbf16, #tpu.memory_space<vmem>>, vector<16x256xbf16>,
    return
  }
  func.func @transform_0(%arg0: i32, %arg1: i32) -> (i32, i32) {
    %c0_i32 = arith.constant 0 : i32
    %c0_i32_0 = arith.constant 0 : i32
    return %arg0, %c0_i32 : i32, i32
  }
  func.func @transform_1(%arg0: i32, %arg1: i32) -> (i32, i32) {
    %c0_i32 = arith.constant 0 : i32
    %c0_i32_0 = arith.constant 0 : i32
    %c0_i32_1 = arith.constant 0 : i32
    return %c0_i32, %c0_i32_0 : i32, i32
  }
  func.func @transform_2(%arg0: i32, %arg1: i32) -> (i32, i32) {
    %c0_i32 = arith.constant 0 : i32
    %c0_i32_0 = arith.constant 0 : i32
    %c0_i32_1 = arith.constant 0 : i32
    return %c0_i32, %c0_i32_0 : i32, i32
  }
  func.func @transform_3(%arg0: i32, %arg1: i32) -> (i32, i32) {
    %c0_i32 = arith.constant 0 : i32
    %c0_i32_0 = arith.constant 0 : i32
    %c0_i32_1 = arith.constant 0 : i32
    return %c0_i32, %c0_i32_0 : i32, i32
  }
  func.func @transform_4(%arg0: i32, %arg1: i32) -> (i32, i32) {
    %c0_i32 = arith.constant 0 : i32
    %c0_i32_0 = arith.constant 0 : i32
    %c0_i32_1 = arith.constant 0 : i32
    return %c0_i32, %c0_i32_0 : i32, i32
  }
  func.func @transform_5(%arg0: i32, %arg1: i32) -> (i32, i32) {
    %c0_i32 = arith.constant 0 : i32
    %c0_i32_0 = arith.constant 0 : i32
    return %c0_i32, %arg1 : i32, i32
  }
  func.func @transform_6(%arg0: i32, %arg1: i32) -> (i32, i32) {
    %c0_i32 = arith.constant 0 : i32
    %c0_i32_0 = arith.constant 0 : i32
    return %c0_i32, %arg1 : i32, i32
  }
  func.func @transform_7(%arg0: i32, %arg1: i32) -> (i32, i32) {
    %c0_i32 = arith.constant 0 : i32
    return %arg0, %arg1 : i32, i32
  }
}

</mosaic_0001>

<llo_original>
// kernel: tpu_custom_call.1
$region0: #{tpu_custom_call.1}
  #allocation0 [shape = 'u32[]', space=smem, size = 0x4, offset = 0x4, fixed_abs, tag = 'smem constant byte address 0x4 - core index']
  #allocation1 [shape = 'u32[72,128]{1,0:T(1,128)}', space=vmem, size = 0x9000, scoped, tag = 'internal scratch']
  #allocation2 [shape = 'bf16[16,32]{1,0:T(8,128)(2,1)}', space=vmem, size = 0x1000, scoped, tag = 'scratch operand']
  %s0 = inlined_call_operand.hbm [shape: bf16[16,32], index: 0, kind: input, shape index: {}]
  %s1 = inlined_call_operand.hbm [shape: bf16[32,32], index: 1, kind: input, shape index: {}]
  %s2 = inlined_call_operand.vmem [shape: f32[1,32], index: 2, kind: input, shape index: {}]
  %s3 = inlined_call_operand.hbm [shape: f32[1,32], index: 3, kind: input, shape index: {}]
  %s4 = inlined_call_operand.hbm [shape: f32[1,32], index: 4, kind: input, shape index: {}]
  %s5 = inlined_call_operand.hbm [shape: bf16[32,256], index: 5, kind: input, shape index: {}]
  %s6 = inlined_call_operand.vmem [shape: f32[1,256], index: 6, kind: input, shape index: {}]
  %s7 = inlined_call_operand.hbm [shape: bf16[16,256], index: 7, kind: output, shape index: {}]
  %s8 = sld [smem:[#allocation0]]
  $region62: #{tpu_custom_call.1} parent=0
    _
  %s10 = ssub.s32 1, %s8
  %s11 = scalar_select 0, %s10, %s8
  $region1: #{tpu_custom_call.1} parent=0
    #allocation3 [shape = 'u8[4096]{0}', space=vmem, size = 0x1000, scoped, tag = 'input window, operand 0, single buffered']
    #allocation4 [shape = 's32[1]{0}', space=sflag, size = 0x4, scoped, tag = 'scoped memory for tpu_custom_call.1']
    #allocation5 [shape = 's32[1]{0}', space=sflag, size = 0x4, scoped, tag = 'scoped memory for tpu_custom_call.1']
    #allocation6 [shape = 'u8[8192]{0}', space=vmem, size = 0x2000, scoped, tag = 'input window, operand 1, single buffered']
    #allocation7 [shape = 's32[1]{0}', space=sflag, size = 0x4, scoped, tag = 'scoped memory for tpu_custom_call.1']
    #allocation8 [shape = 'u8[512]{0}', space=vmem, size = 0x400, scoped, tag = 'input window, operand 3, single buffered']
    #allocation9 [shape = 'u8[512]{0}', space=vmem, size = 0x400, scoped, tag = 'input window, operand 4, single buffered']
    #allocation10 [shape = 's32[1]{0}', space=sflag, size = 0x4, scoped, tag = 'scoped memory for tpu_custom_call.1']
    #allocation11 [shape = 'u8[16384]{0}', space=vmem, size = 0x4000, scoped, tag = 'input window, operand 5, single buffered']
    #allocation12 [shape = 'u8[8192]{0}', space=vmem, size = 0x2000, scoped, tag = 'output window, operand 0, single buffered']
    %12 = vsyncpa [#allocation4], 0
    %13 = vsyncpa [#allocation7], 0
    %14 = vsyncpa [#allocation10], 0
    %15 = vsyncpa [#allocation5], 0
    // Predicated region
    $region2: #{tpu_custom_call.1} parent=1 // pred_check
      _
    $region3: #{tpu_custom_call.1} parent=1 // pred_check_branch
      %17 = sbr.rel (0) target = $region5
    $region4: #{tpu_custom_call.1} parent=1 // pred_region
      %19 = vsyncadd [#allocation4], 0
      %s20 = sshll.u32 %s0, 4
      %s21 = int_to_ptr.hbm [resolvable:$true] %s20
      %s22 = sshll.u32 [#allocation3], 4
      %s23 = int_to_ptr.vmem [resolvable:$true] %s22
      %28 = dma.hbm_to_vmem [thread:$0]  %s21, 128, %s23, [#allocation4], 64, 64, 4
    $region5: #{tpu_custom_call.1} parent=1 // pred_fallthru
      _
    // Predicated region
    $region6: #{tpu_custom_call.1} parent=1 // pred_check
      _
    $region7: #{tpu_custom_call.1} parent=1 // pred_check_branch
      %30 = sbr.rel (0) target = $region9
    $region8: #{tpu_custom_call.1} parent=1 // pred_region
      %32 = vsyncadd [#allocation7], 0
      %s33 = sshll.u32 %s1, 4
      %s34 = int_to_ptr.hbm [resolvable:$true] %s33
      %s35 = sshll.u32 [#allocation6], 4
      %s36 = int_to_ptr.vmem [resolvable:$true] %s35
      %41 = dma.hbm_to_vmem [thread:$0]  %s34, 256, %s36, [#allocation7], 64, 64, 4
    $region9: #{tpu_custom_call.1} parent=1 // pred_fallthru
      _
    // Predicated region
    $region10: #{tpu_custom_call.1} parent=1 // pred_check
      _
    $region11: #{tpu_custom_call.1} parent=1 // pred_check_branch
      %43 = sbr.rel (0) target = $region13
    $region12: #{tpu_custom_call.1} parent=1 // pred_region
      _
    $region13: #{tpu_custom_call.1} parent=1 // pred_fallthru
      _
    // Predicated region
    $region14: #{tpu_custom_call.1} parent=1 // pred_check
      _
    $region15: #{tpu_custom_call.1} parent=1 // pred_check_branch
      %45 = sbr.rel (0) target = $region17
    $region16: #{tpu_custom_call.1} parent=1 // pred_region
      %47 = vsyncadd [#allocation7], 0
      %s49 = sshll.u32 %s3, 4
      %s50 = int_to_ptr.hbm [resolvable:$true] %s49
      %s51 = sshll.u32 [#allocation8], 4
      %s52 = int_to_ptr.vmem [resolvable:$true] %s51
      %54 = dma.hbm_to_vmem [thread:$0]  %s50, 16, %s52, [#allocation7]
    $region17: #{tpu_custom_call.1} parent=1 // pred_fallthru
      _
    // Predicated region
    $region18: #{tpu_custom_call.1} parent=1 // pred_check
      _
    $region19: #{tpu_custom_call.1} parent=1 // pred_check_branch
      %56 = sbr.rel (0) target = $region21
    $region20: #{tpu_custom_call.1} parent=1 // pred_region
      %58 = vsyncadd [#allocation10], 0
      %s60 = sshll.u32 %s4, 4
      %s61 = int_to_ptr.hbm [resolvable:$true] %s60
      %s62 = sshll.u32 [#allocation9], 4
      %s63 = int_to_ptr.vmem [resolvable:$true] %s62
      %65 = dma.hbm_to_vmem [thread:$0]  %s61, 16, %s63, [#allocation10]
    $region21: #{tpu_custom_call.1} parent=1 // pred_fallthru
      _
    // Predicated region
    $region22: #{tpu_custom_call.1} parent=1 // pred_check
      _
    $region23: #{tpu_custom_call.1} parent=1 // pred_check_branch
      %67 = sbr.rel (0) target = $region25
    $region24: #{tpu_custom_call.1} parent=1 // pred_region
      %69 = vsyncadd [#allocation10], 0
      %s70 = sshll.u32 %s5, 4
      %s71 = int_to_ptr.hbm [resolvable:$true] %s70
      %s72 = sshll.u32 [#allocation11], 4
      %s73 = int_to_ptr.vmem [resolvable:$true] %s72
      %78 = dma.hbm_to_vmem [thread:$0]  %s71, 512, %s73, [#allocation10], 128, 128, 8
    $region25: #{tpu_custom_call.1} parent=1 // pred_fallthru
      _
    // Predicated region
    $region26: #{tpu_custom_call.1} parent=1 // pred_check
      _
    $region27: #{tpu_custom_call.1} parent=1 // pred_check_branch
      %80 = sbr.rel (0) target = $region29
    $region28: #{tpu_custom_call.1} parent=1 // pred_region
      _
    $region29: #{tpu_custom_call.1} parent=1 // pred_fallthru
      _
    // Predicated region
    $region30: #{tpu_custom_call.1} parent=1 // pred_check
      _
    $region31: #{tpu_custom_call.1} parent=1 // pred_check_branch
      %82 = sbr.rel (0) target = $region33
    $region32: #{tpu_custom_call.1} parent=1 // pred_region
      %84 = dma.done [#allocation4], 128
    $region33: #{tpu_custom_call.1} parent=1 // pred_fallthru
      _
    // Predicated region
    $region34: #{tpu_custom_call.1} parent=1 // pred_check
      _
    $region35: #{tpu_custom_call.1} parent=1 // pred_check_branch
      %86 = sbr.rel (0) target = $region37
    $region36: #{tpu_custom_call.1} parent=1 // pred_region
      %88 = dma.done [#allocation7], 256
    $region37: #{tpu_custom_call.1} parent=1 // pred_fallthru
      _
    // Predicated region
    $region38: #{tpu_custom_call.1} parent=1 // pred_check
      _
    $region39: #{tpu_custom_call.1} parent=1 // pred_check_branch
      %90 = sbr.rel (0) target = $region41
    $region40: #{tpu_custom_call.1} parent=1 // pred_region
      %92 = dma.done [#allocation7], 16
    $region41: #{tpu_custom_call.1} parent=1 // pred_fallthru
      _
    // Predicated region
    $region42: #{tpu_custom_call.1} parent=1 // pred_check
      _
    $region43: #{tpu_custom_call.1} parent=1 // pred_check_branch
      %94 = sbr.rel (0) target = $region45
    $region44: #{tpu_custom_call.1} parent=1 // pred_region
      %96 = dma.done [#allocation10], 16
    $region45: #{tpu_custom_call.1} parent=1 // pred_fallthru
      _
    // Predicated region
    $region46: #{tpu_custom_call.1} parent=1 // pred_check
      _
    $region47: #{tpu_custom_call.1} parent=1 // pred_check_branch
      %98 = sbr.rel (0) target = $region49
    $region48: #{tpu_custom_call.1} parent=1 // pred_region
      %100 = dma.done [#allocation10], 512
    $region49: #{tpu_custom_call.1} parent=1 // pred_fallthru
      _
    %p102 = scmp.eq.s32.totalorder 0, 0
    // Predicated region
    $region50: #{tpu_custom_call.1} parent=1 // pred_check
      %p103 = pneg %p102
    $region51: #{tpu_custom_call.1} parent=1 // pred_check_branch
      %105 = sbr.rel (%p103) target = $region53
    $region52: #{tpu_custom_call.1} parent=1 // pred_region
      %v106 = vld [vmem:[#allocation3] sm:$0xf]
      %v107 = vld [vmem:[#allocation3 + $0x4] sm:$0xf]
      %v108 = vld [vmem:[#allocation6] sm:$0xf]
      %v109 = vld [vmem:[#allocation6 + $0x4] sm:$0xf]
      %v110 = vld [vmem:[#allocation6 + $0x8] sm:$0xf]
      %v111 = vld [vmem:[#allocation6 + $0xc] sm:$0xf]
      %v112 = vld [vmem:[%s2] sm:$0x1]
      %v114 = vperm.slane %v112, 0
      %v118 = vunpack.c.l.b16 %v106
      %v119 = vunpack.c.l.b16 %v107
      %v120 = vpack.c.b16 %v119, %v118
      %v125 = vunpack.c.l.b16 %v108
      %v126 = vunpack.c.l.b16 %v109
      %v127 = vunpack.c.l.b16 %v110
      %v128 = vunpack.c.l.b16 %v111
      %v129 = vpack.c.b16 %v126, %v125
      %v130 = vpack.c.b16 %v128, %v127
      %vm133 = vcmask 261120
      %v135 = vsel %vm133, %v120, 0
      %137 = vmatpush.bf16.msra.mxu0 0
      %138 = vmatpush.bf16.msra.mxu0 0
      %139 = vmatpush.bf16.msra.mxu0 0
      %140 = vmatpush.bf16.msra.mxu0 0
      %141 = vmatpush.bf16.msra.mxu0 0
      %142 = vmatpush.bf16.msra.mxu0 0
      %143 = vmatpush.bf16.msra.mxu0 %v130
      %144 = vmatpush.bf16.msra.mxu0 %v129
      %145 = vmatmul.bf16.gmra.mxu0 %v135
      %v146 = vpop.f32.mrf.mxu0
      %v147 = vadd.f32 %v114, %v146
      %v148 = vpop.f32.mrf.mxu0
      %v149 = vadd.f32 %v114, %v148
      %150 = vdwg.mxu0
      %v151 = vmul.f32 %v147, 0.5
      %v152 = vmul.f32 %v149, 0.5
      %v153 = vmul.f32 %v147, 0.70710677
      %v154 = vmul.f32 %v149, 0.70710677
      %vm155 = vcmp.ge.f32.partialorder %v153, 0.0
      %vm156 = vcmp.ge.f32.partialorder %v154, 0.0
      %v157 = vsel %vm155, 1.0, -1.0
      %v158 = vsel %vm156, 1.0, -1.0
      %v159 = vand.u32 2147483647, %v153
      %v160 = vand.u32 2147483647, %v154
      %v161 = vmul.f32 %v159, 0.3275911
      %v162 = vmul.f32 %v160, 0.3275911
      %v163 = vadd.f32 %v161, 1.0
      %v164 = vadd.f32 %v162, 1.0
      %v165 = vrcp.pop %v163
      %v166 = vmul.f32 %v163, %v165
      %v167 = vsub.f32 1.0, %v166
      %v168 = vmul.f32 %v165, %v167
      %v169 = vadd.f32 %v165, %v168
      %vm170 = vweird.f32 %v163
      %vm171 = vweird.f32 %v165
      %vm172 = vmor %vm170, %vm171
      %v173 = vsel %vm172, %v165, %v169
      %v174 = vand.u32 2147483647, %v163
      %vm175 = vcmp.eq.f32.partialorder %v174, 8.507059e+37
      %v176 = vand.u32 %v163, 2147483648
      %v177 = vor.u32 1.1754944e-38, %v176
      %v178 = vsel %vm175, %v177, %v173
      %v179 = vmul.f32 1.0, %v178
      %v180 = vrcp.pop %v164
      %v181 = vmul.f32 %v164, %v180
      %v182 = vsub.f32 1.0, %v181
      %v183 = vmul.f32 %v180, %v182
      %v184 = vadd.f32 %v180, %v183
      %vm185 = vweird.f32 %v164
      %vm186 = vweird.f32 %v180
      %vm187 = vmor %vm185, %vm186
      %v188 = vsel %vm187, %v180, %v184
      %v189 = vand.u32 2147483647, %v164
      %vm190 = vcmp.eq.f32.partialorder %v189, 8.507059e+37
      %v191 = vand.u32 %v164, 2147483648
      %v192 = vor.u32 1.1754944e-38, %v191
      %v193 = vsel %vm190, %v192, %v188
      %v194 = vmul.f32 1.0, %v193
      %v195 = vmul.f32 %v179, 1.0614054
      %v196 = vmul.f32 %v194, 1.0614054
      %v197 = vadd.f32 %v195, -1.4531521
      %v198 = vadd.f32 %v196, -1.4531521
      %v199 = vmul.f32 %v197, %v179
      %v200 = vmul.f32 %v198, %v194
      %v201 = vadd.f32 %v199, 1.4214138
      %v202 = vadd.f32 %v200, 1.4214138
      %v203 = vmul.f32 %v201, %v179
      %v204 = vmul.f32 %v202, %v194
      %v205 = vadd.f32 %v203, -0.28449672
      %v206 = vadd.f32 %v204, -0.28449672
      %v207 = vmul.f32 %v205, %v179
      %v208 = vmul.f32 %v206, %v194
      %v209 = vadd.f32 %v207, 0.2548296
      %v210 = vadd.f32 %v208, 0.2548296
      %v211 = vmul.f32 %v209, %v179
      %v212 = vmul.f32 %v210, %v194
      %v213 = vsub.f32 0.0, %v159
      %v214 = vsub.f32 0.0, %v160
      %v215 = vmul.f32 %v213, %v159
      %v216 = vmul.f32 %v214, %v160
      %v217 = vmul.f32 %v215, 1.442695
      %v218 = vpow.pop %v217
      %v219 = vmul.f32 %v216, 1.442695
      %v220 = vpow.pop %v219
      %v221 = vmul.f32 %v211, %v218
      %v222 = vmul.f32 %v212, %v220
      %v223 = vsub.f32 1.0, %v221
      %v224 = vsub.f32 1.0, %v222
      %v225 = vmul.f32 %v157, %v223
      %v226 = vmul.f32 %v158, %v224
      %v227 = vadd.f32 %v225, 1.0
      %v228 = vadd.f32 %v226, 1.0
      %v229 = vmul.f32 %v151, %v227
      %v230 = vmul.f32 %v152, %v228
      %v231 = vsel %vm133, %v229, 0.0
      %232 = vadd.xlane.f32.xlu0 %v231
      %v233 = vpop.xlane.xlu0 %232
      %v234 = vsel %vm133, %v230, 0.0
      %235 = vadd.xlane.f32.xlu0 %v234
      %v236 = vpop.xlane.xlu0 %235
      %v237 = vrcp.pop 32.0
      %v238 = vmul.f32 32.0, %v237
      %v239 = vsub.f32 1.0, %v238
      %v240 = vmul.f32 %v237, %v239
      %v241 = vadd.f32 %v237, %v240
      %vm242 = vweird.f32 %v237
      %v243 = vsel %vm242, %v237, %v241
      %v244 = vmul.f32 %v233, %v243
      %v245 = vmul.f32 %v236, %v243
      %v246 = vsub.f32 %v229, %v244
      %v247 = vsub.f32 %v230, %v245
      %v248 = vmul.f32 %v246, %v246
      %v249 = vmul.f32 %v247, %v247
      %v250 = vsel %vm133, %v248, 0.0
      %251 = vadd.xlane.f32.xlu0 %v250
      %v252 = vpop.xlane.xlu0 %251
      %v253 = vsel %vm133, %v249, 0.0
      %254 = vadd.xlane.f32.xlu0 %v253
      %v255 = vpop.xlane.xlu0 %254
      %v256 = vmul.f32 %v252, %v243
      %v257 = vmul.f32 %v255, %v243
      %v258 = vadd.f32 %v256, 1e-12
      %v259 = vadd.f32 %v257, 1e-12
      %v260 = vrsqrt.pop %v258
      %v261 = vmul.f32 %v260, %v258
      %v262 = vmul.f32 %v261, %v260
      %v263 = vmul.f32 0.5, %v262
      %v264 = vsub.f32 1.5, %v263
      %v265 = vmul.f32 %v260, %v264
      %vm266 = vweird.f32 %v258
      %vm267 = vweird.f32 %v260
      %vm268 = vmor %vm266, %vm267
      %v269 = vsel %vm268, %v260, %v265
      %v270 = vrsqrt.pop %v259
      %v271 = vmul.f32 %v270, %v259
      %v272 = vmul.f32 %v271, %v270
      %v273 = vmul.f32 0.5, %v272
      %v274 = vsub.f32 1.5, %v273
      %v275 = vmul.f32 %v270, %v274
      %vm276 = vweird.f32 %v259
      %vm277 = vweird.f32 %v270
      %vm278 = vmor %vm276, %vm277
      %v279 = vsel %vm278, %v270, %v275
      %v280 = vmul.f32 %v246, %v269
      %v281 = vmul.f32 %v247, %v279
      %v282 = vld [vmem:[#allocation8] sm:$0x1]
      %v284 = vperm.slane %v282, 0
      %v286 = vmul.f32 %v280, %v284
      %v287 = vmul.f32 %v281, %v284
      %v288 = vld [vmem:[#allocation9] sm:$0x1]
      %v290 = vperm.slane %v288, 0
      %v292 = vadd.f32 %v286, %v290
      %v293 = vadd.f32 %v287, %v290
      %v294 = vpack.c.bf16 %v292, %v292
      %v295 = vpack.c.bf16 %v293, %v293
      %vm296 = vcmask 257024
      %297 = vst.msk [vmem:[#allocation2] sm:$0xf] %vm296, %v294
      %298 = vst.msk [vmem:[#allocation2 + $0x4] sm:$0xf] %vm296, %v295
    $region53: #{tpu_custom_call.1} parent=1 // pred_fallthru
      _
    %v299 = vld [vmem:[#allocation2] sm:$0xf]
    %v300 = vld [vmem:[#allocation2 + $0x4] sm:$0xf]
    %v301 = vld [vmem:[#allocation11] sm:$0xff]
    %v302 = vld [vmem:[#allocation11 + $0x8] sm:$0xff]
    %v303 = vld [vmem:[#allocation11 + $0x10] sm:$0xff]
    %v304 = vld [vmem:[#allocation11 + $0x18] sm:$0xff]
    %v305 = vld [vmem:[%s6] sm:$0x3]
    %v307 = vperm.slane %v305, 0
    %v308 = vperm.slane %v305, 1
    %v313 = vunpack.c.l.b16 %v299
    %v314 = vunpack.c.l.b16 %v300
    %v315 = vpack.c.b16 %v314, %v313
    %v320 = vunpack.c.l.b16 %v301
    %v321 = vunpack.c.h.b16 %v301
    %v322 = vunpack.c.l.b16 %v302
    %v323 = vunpack.c.h.b16 %v302
    %v324 = vunpack.c.l.b16 %v303
    %v325 = vunpack.c.h.b16 %v303
    %v326 = vunpack.c.l.b16 %v304
    %v327 = vunpack.c.h.b16 %v304
    %v328 = vpack.c.b16 %v322, %v320
    %v329 = vpack.c.b16 %v323, %v321
    %v330 = vpack.c.b16 %v326, %v324
    %v331 = vpack.c.b16 %v327, %v325
    %vm336 = vcmask 261120
    %v338 = vsel %vm336, %v315, 0
    %340 = vmatpush.bf16.msra.mxu0 0
    %341 = vmatpush.bf16.msra.mxu0 0
    %342 = vmatpush.bf16.msra.mxu0 0
    %343 = vmatpush.bf16.msra.mxu0 0
    %344 = vmatpush.bf16.msra.mxu0 0
    %345 = vmatpush.bf16.msra.mxu0 0
    %346 = vmatpush.bf16.msra.mxu0 %v330
    %347 = vmatpush.bf16.msra.mxu0 %v328
    %348 = vmatmul.bf16.gmra.mxu0 %v338
    %v349 = vpop.f32.mrf.mxu0
    %v350 = vadd.f32 %v307, %v349
    %v351 = vpop.f32.mrf.mxu0
    %v352 = vadd.f32 %v307, %v351
    %353 = vdwg.mxu0
    %354 = vmatpush.bf16.msra.mxu0 0
    %355 = vmatpush.bf16.msra.mxu0 0
    %356 = vmatpush.bf16.msra.mxu0 0
    %357 = vmatpush.bf16.msra.mxu0 0
    %358 = vmatpush.bf16.msra.mxu0 0
    %359 = vmatpush.bf16.msra.mxu0 0
    %360 = vmatpush.bf16.msra.mxu0 %v331
    %361 = vmatpush.bf16.msra.mxu0 %v329
    %362 = vmatmul.bf16.gmra.mxu0 %v338
    %v363 = vpop.f32.mrf.mxu0
    %v364 = vadd.f32 %v308, %v363
    %v365 = vpop.f32.mrf.mxu0
    %v366 = vadd.f32 %v308, %v365
    %367 = vdwg.mxu0
    %v368 = vpack.c.bf16 %v364, %v350
    %v369 = vpack.c.bf16 %v366, %v352
    %370 = vst [vmem:[#allocation12] sm:$0xff] %v368
    %371 = vst [vmem:[#allocation12 + $0x8] sm:$0xff] %v369
    // Predicated region
    $region54: #{tpu_custom_call.1} parent=1 // pred_check
      _
    $region55: #{tpu_custom_call.1} parent=1 // pred_check_branch
      %373 = sbr.rel (0) target = $region57
    $region56: #{tpu_custom_call.1} parent=1 // pred_region
      %375 = vsyncadd [#allocation5], 0
      %s376 = sshll.u32 [#allocation12], 4
      %s377 = int_to_ptr.vmem [resolvable:$true] %s376
      %s378 = sshll.u32 %s7, 4
      %s379 = int_to_ptr.hbm [resolvable:$true] %s378
      %384 = dma.vmem_to_hbm [thread:$0]  %s377, 256, %s379, [#allocation5], 128, 128, 8
    $region57: #{tpu_custom_call.1} parent=1 // pred_fallthru
      _
    // Predicated region
    $region58: #{tpu_custom_call.1} parent=1 // pred_check
      _
    $region59: #{tpu_custom_call.1} parent=1 // pred_check_branch
      %386 = sbr.rel (0) target = $region61
    $region60: #{tpu_custom_call.1} parent=1 // pred_region
      %388 = dma.done [#allocation5], 256
    $region61: #{tpu_custom_call.1} parent=1 // pred_fallthru
      _
    %389 = vsyncpa [#allocation4], 1
    %390 = vsyncpa [#allocation7], 1
    %391 = vsyncpa [#allocation10], 1
    %392 = vsyncpa [#allocation5], 1

</llo_original>
